<compile_context>
chip_gen: v7x
topology: tpu7x:2x2x1
jax: 0.10.0
libtpu: 0.0.40
codegen_flags: <defaults>
</compile_context>

<pallas_src>
from functools import partial

import jax
import jax.numpy as jnp
from jax import lax
from jax.experimental import pallas as pl
from jax.experimental.pallas import tpu as pltpu


def bigram_kernel(tok_ref, w_ev1_ref, b1_ref, w2_ref, b2_ref, out_ref):
    tile_b, t_len = tok_ref.shape          # (TILE_B, T) int32
    v_pad = w_ev1_ref.shape[0]
    cdt = w_ev1_ref.dtype                  # matmul operand dtype (bf16 or f32)

    # --- averaged one-hot counts built in-kernel (no HBM round trip) --------
    tok = tok_ref[...]                                               # (TILE_B, T)
    v_iota = lax.broadcasted_iota(jnp.int32, (tile_b, v_pad), 1)     # (TILE_B, Vp)

    # Split partial accumulators: lets the 4 VALU slots co-issue instead of a
    # single length-T dependent add chain.
    n_parts = max(1, min(4, t_len))
    parts = [jnp.zeros((tile_b, v_pad), jnp.float32) for _ in range(n_parts)]
    for t in range(t_len):                 # static, fully unrolled (T small)
        parts[t % n_parts] = parts[t % n_parts] + (
            v_iota == tok[:, t:t + 1]).astype(jnp.float32)
    counts = parts[0]
    for p in parts[1:]:
        counts = counts + p
    # mean scaling kept in f32 (exact), cast only the MXU operand
    mean_oh = (counts * (1.0 / t_len)).astype(cdt)                   # (TILE_B, Vp)

    # --- fused (Emb @ W1) matmul + f32 bias/relu epilogue -------------------
    h = jnp.dot(mean_oh, w_ev1_ref[...],
                preferred_element_type=jnp.float32)                  # (TILE_B, Hp)
    h = jnp.maximum(h + b1_ref[...], 0.0)

    # --- fc2 -----------------------------------------------------------------
    out = jnp.dot(h.astype(cdt), w2_ref[...],
                  preferred_element_type=jnp.float32) + b2_ref[...]  # (TILE_B, Vp)
    out_ref[...] = out.astype(out_ref.dtype)


def _rup(x, m):
    return (x + m - 1) // m * m


def prepare_params(emb_table, w1, b1, w2, b2, *, matmul_dtype=jnp.bfloat16):
    """One-time weight preparation (hoisted out of the per-call forward).

    - Pre-fuses Emb @ W1 -> (V, H)  (exact: no nonlinearity between them).
    - Zero-pads every lane dim to a multiple of 128 (lane-dense tiles,
      unmasked stores) and casts matmul operands to `matmul_dtype`.
    Weights w1/w2 are given as (in, out) i.e. already W^T of the nn.Linear.
    """
    V, E = emb_table.shape
    H = w1.shape[1]
    V_pad, H_pad = _rup(V, 128), _rup(H, 128)

    w_ev1 = jnp.dot(emb_table.astype(jnp.float32),
                    w1.astype(jnp.float32))                    # (V, H), f32 fusion

    w_ev1_p = jnp.zeros((V_pad, H_pad), matmul_dtype).at[:V, :H].set(
        w_ev1.astype(matmul_dtype))
    w2_p = jnp.zeros((H_pad, V_pad), matmul_dtype).at[:H, :V].set(
        w2.astype(matmul_dtype))
    b1_p = jnp.zeros((1, H_pad), jnp.float32).at[:, :H].set(
        b1.reshape(1, H).astype(jnp.float32))
    b2_p = jnp.zeros((1, V_pad), jnp.float32).at[:, :V].set(
        b2.reshape(1, V).astype(jnp.float32))
    return w_ev1_p, b1_p, w2_p, b2_p


@partial(jax.jit, static_argnames=("vocab_size", "tile_b_target", "out_dtype"))
def bigram_forward(tokens, w_ev1_p, b1_p, w2_p, b2_p, *,
                   vocab_size, tile_b_target=128, out_dtype=jnp.float32):
    """tokens: (B, T) int. Prepared/padded params from prepare_params().
    Returns logits (B, vocab_size) in `out_dtype`."""
    B, T = tokens.shape
    V_pad, H_pad = w_ev1_p.shape

    # Batch tiling: sublane-aligned, target 128 rows (fills MXU), and always
    # >=2 grid steps so the "parallel" axis splits across both v7x TCs.
    B8 = _rup(B, 8)
    B_pad = max(B8, 16)
    tile_b = max(8, _rup(min(tile_b_target, B_pad // 2), 8))
    B_pad = _rup(B_pad, tile_b)

    tok_p = jnp.zeros((B_pad, T), jnp.int32).at[:B, :].set(tokens.astype(jnp.int32))

    grid = (B_pad // tile_b,)
    out = pl.pallas_call(
        bigram_kernel,
        out_shape=jax.ShapeDtypeStruct((B_pad, V_pad), out_dtype),
        grid=grid,
        in_specs=[
            pl.BlockSpec((tile_b, T),     lambda i: (i, 0)),  # tokens tile (int32)
            pl.BlockSpec((V_pad, H_pad),  lambda i: (0, 0)),  # Emb @ W1 (pre-fused)
            pl.BlockSpec((1, H_pad),      lambda i: (0, 0)),  # b1
            pl.BlockSpec((H_pad, V_pad),  lambda i: (0, 0)),  # W2^T
            pl.BlockSpec((1, V_pad),      lambda i: (0, 0)),  # b2
        ],
        out_specs=pl.BlockSpec((tile_b, V_pad), lambda i: (i, 0)),
        compiler_params=pltpu.CompilerParams(
            dimension_semantics=("parallel",)),               # both TCs on v7x
    )(tok_p, w_ev1_p, b1_p, w2_p, b2_p)

    return out[:B, :vocab_size]


def reference_forward(tokens, emb_table, w1, b1, w2, b2):
    e = emb_table[tokens]                  # (B, T, E)
    m = jnp.mean(e, axis=1)                # (B, E)
    h = jnp.maximum(m @ w1 + b1, 0.0)      # (B, H)
    return h @ w2 + b2                     # (B, V)


if __name__ == "__main__":
    # Small shapes consistent with the module (vocab=20 as in bigram_train).
    vocab_size, embedding_size, hidden_size = 20, 16, 32
    batch, seq = 4, 8

    key = jax.random.PRNGKey(0)
    k_emb, k_w1, k_b1, k_w2, k_b2, k_tok = jax.random.split(key, 6)

    # Deterministic parameter init (shapes per nn.Embedding / nn.Linear, W^T).
    emb_table = jax.random.normal(k_emb, (vocab_size, embedding_size), jnp.float32)
    w1 = jax.random.normal(k_w1, (embedding_size, hidden_size), jnp.float32) * 0.1
    b1 = jax.random.normal(k_b1, (hidden_size,), jnp.float32) * 0.1
    w2 = jax.random.normal(k_w2, (hidden_size, vocab_size), jnp.float32) * 0.1
    b2 = jax.random.normal(k_b2, (vocab_size,), jnp.float32) * 0.1

    tokens = jax.random.randint(k_tok, (batch, seq), 0, vocab_size, jnp.int32)

    ref = reference_forward(tokens, emb_table, w1, b1, w2, b2)

    # --- f32 matmul operands: exact-ish vs reference (only fp reassociation
    #     from the offline Emb@W1 fusion) --------------------------------------
    params_f32 = prepare_params(emb_table, w1, b1, w2, b2,
                                matmul_dtype=jnp.float32)
    logits_f32 = bigram_forward(tokens, *params_f32, vocab_size=vocab_size)
    logits_f32 = jax.block_until_ready(logits_f32)
    assert logits_f32.shape == (batch, vocab_size)
    assert jnp.allclose(logits_f32, ref, atol=1e-4, rtol=1e-4), \
        "f32 mismatch vs reference"

    # --- default bf16 matmul operands (MXU-native on v5e/v6e/v7x), f32 acc ----
    params_bf16 = prepare_params(emb_table, w1, b1, w2, b2)  # bf16 default
    logits_bf16 = bigram_forward(tokens, *params_bf16, vocab_size=vocab_size)
    logits_bf16 = jax.block_until_ready(logits_bf16)
    assert jnp.allclose(logits_bf16, ref, atol=5e-2, rtol=5e-2), \
        "bf16 mismatch vs reference"

    # --- optional bf16 logits (halves output writeback when memory-bound) -----
    logits_bf16_out = bigram_forward(tokens, *params_bf16, vocab_size=vocab_size,
                                     out_dtype=jnp.bfloat16)
    logits_bf16_out = jax.block_until_ready(logits_bf16_out)
    assert jnp.allclose(logits_bf16_out.astype(jnp.float32), ref,
                        atol=5e-2, rtol=5e-2), "bf16-out mismatch vs reference"

    print("KERNEL_OK")
</pallas_src>

<mosaic_0001>
module attributes {stable_mosaic.version = 11 : i64} {
  func.func @bigram_kernel(%arg0: i32, %arg1: memref<8x8xi32, #tpu.memory_space<vmem>>, %arg2: memref<128x128xf32, #tpu.memory_space<vmem>>, %arg3: memref<1x128xf32, #tpu.memory_space<vmem>>, %arg4: memref<128x128xf32, #tpu.memory_space<vmem>>, %arg5: memref<1x128xf32, #tpu.memory_space<vmem>>, %arg6: memref<8x128xf32, #tpu.memory_space<vmem>>) attributes {dimension_semantics = [#tpu.dimension_semantics<parallel>], iteration_bounds = array<i64: 2>, scalar_prefetch = 0 : i64, scratch_operands = 0 : i64, tpu.core_type = #tpu.core_type<tc>, window_params = [{transform_indices = @transform_0, window_bounds = array<i64: 8, 8>}, {pipeline_mode = #tpu.pipeline_mode<synchronous>, transform_indices = @transform_1, window_bounds = array<i64: 128, 128>}, {pipeline_mode = #tpu.pipeline_mode<synchronous>, transform_indices = @transform_2, window_bounds = array<i64: 1, 128>}, {pipeline_mode = #tpu.pipeline_mode<synchronous>, transform_indices = @transform_3, window_bounds = array<i64: 128, 128>}, {pipeline_mode = #tpu.pipeline_mode<synchronous>, transform_indices = @transform_4, window_bounds = array<i64: 1, 128>}, {transform_indices = @transform_5, window_bounds = array<i64: 8, 128>}]} {
    %c0 = arith.constant 0 : index
    %c0_0 = arith.constant 0 : index
    %0 = vector.load %arg1[%c0, %c0_0] : memref<8x8xi32, #tpu.memory_space<vmem>>, vector<8x8xi32>
    %1 = tpu.iota {dimensions = array<i32: 1>} : vector<8x128xi32>
    %cst = arith.constant 0.000000e+00 : f32
    %2 = vector.broadcast %cst : f32 to vector<8x128xf32>
    %cst_1 = arith.constant 0.000000e+00 : f32
    %3 = vector.broadcast %cst_1 : f32 to vector<8x128xf32>
    %cst_2 = arith.constant 0.000000e+00 : f32
    %4 = vector.broadcast %cst_2 : f32 to vector<8x128xf32>
    %cst_3 = arith.constant 0.000000e+00 : f32
    %5 = vector.broadcast %cst_3 : f32 to vector<8x128xf32>
    %6 = vector.extract_strided_slice %0 {offsets = [0, 0], sizes = [8, 1], strides = [1, 1]} : vector<8x8xi32> to vector<8x1xi32>
    %7 = vector.broadcast %6 : vector<8x1xi32> to vector<8x128xi32>
    %8 = arith.cmpi eq, %1, %7 : vector<8x128xi32>
    %9 = arith.extui %8 : vector<8x128xi1> to vector<8x128xi32>
    %10 = arith.sitofp %9 : vector<8x128xi32> to vector<8x128xf32>
    %11 = arith.addf %2, %10 : vector<8x128xf32>
    %12 = vector.extract_strided_slice %0 {offsets = [0, 1], sizes = [8, 1], strides = [1, 1]} : vector<8x8xi32> to vector<8x1xi32>
    %13 = vector.broadcast %12 : vector<8x1xi32> to vector<8x128xi32>
    %14 = arith.cmpi eq, %1, %13 : vector<8x128xi32>
    %15 = arith.extui %14 : vector<8x128xi1> to vector<8x128xi32>
    %16 = arith.sitofp %15 : vector<8x128xi32> to vector<8x128xf32>
    %17 = arith.addf %3, %16 : vector<8x128xf32>
    %18 = vector.extract_strided_slice %0 {offsets = [0, 2], sizes = [8, 1], strides = [1, 1]} : vector<8x8xi32> to vector<8x1xi32>
    %19 = vector.broadcast %18 : vector<8x1xi32> to vector<8x128xi32>
    %20 = arith.cmpi eq, %1, %19 : vector<8x128xi32>
    %21 = arith.extui %20 : vector<8x128xi1> to vector<8x128xi32>
    %22 = arith.sitofp %21 : vector<8x128xi32> to vector<8x128xf32>
    %23 = arith.addf %4, %22 : vector<8x128xf32>
    %24 = vector.extract_strided_slice %0 {offsets = [0, 3], sizes = [8, 1], strides = [1, 1]} : vector<8x8xi32> to vector<8x1xi32>
    %25 = vector.broadcast %24 : vector<8x1xi32> to vector<8x128xi32>
    %26 = arith.cmpi eq, %1, %25 : vector<8x128xi32>
    %27 = arith.extui %26 : vector<8x128xi1> to vector<8x128xi32>
    %28 = arith.sitofp %27 : vector<8x128xi32> to vector<8x128xf32>
    %29 = arith.addf %5, %28 : vector<8x128xf32>
    %30 = vector.extract_strided_slice %0 {offsets = [0, 4], sizes = [8, 1], strides = [1, 1]} : vector<8x8xi32> to vector<8x1xi32>
    %31 = vector.broadcast %30 : vector<8x1xi32> to vector<8x128xi32>
    %32 = arith.cmpi eq, %1, %31 : vector<8x128xi32>
    %33 = arith.extui %32 : vector<8x128xi1> to vector<8x128xi32>
    %34 = arith.sitofp %33 : vector<8x128xi32> to vector<8x128xf32>
    %35 = arith.addf %11, %34 : vector<8x128xf32>
    %36 = vector.extract_strided_slice %0 {offsets = [0, 5], sizes = [8, 1], strides = [1, 1]} : vector<8x8xi32> to vector<8x1xi32>
    %37 = vector.broadcast %36 : vector<8x1xi32> to vector<8x128xi32>
    %38 = arith.cmpi eq, %1, %37 : vector<8x128xi32>
    %39 = arith.extui %38 : vector<8x128xi1> to vector<8x128xi32>
    %40 = arith.sitofp %39 : vector<8x128xi32> to vector<8x128xf32>
    %41 = arith.addf %17, %40 : vector<8x128xf32>
    %42 = vector.extract_strided_slice %0 {offsets = [0, 6], sizes = [8, 1], strides = [1, 1]} : vector<8x8xi32> to vector<8x1xi32>
    %43 = vector.broadcast %42 : vector<8x1xi32> to vector<8x128xi32>
    %44 = arith.cmpi eq, %1, %43 : vector<8x128xi32>
    %45 = arith.extui %44 : vector<8x128xi1> to vector<8x128xi32>
    %46 = arith.sitofp %45 : vector<8x128xi32> to vector<8x128xf32>
    %47 = arith.addf %23, %46 : vector<8x128xf32>
    %48 = vector.extract_strided_slice %0 {offsets = [0, 7], sizes = [8, 1], strides = [1, 1]} : vector<8x8xi32> to vector<8x1xi32>
    %49 = vector.broadcast %48 : vector<8x1xi32> to vector<8x128xi32>
    %50 = arith.cmpi eq, %1, %49 : vector<8x128xi32>
    %51 = arith.extui %50 : vector<8x128xi1> to vector<8x128xi32>
    %52 = arith.sitofp %51 : vector<8x128xi32> to vector<8x128xf32>
    %53 = arith.addf %29, %52 : vector<8x128xf32>
    %54 = arith.addf %35, %41 : vector<8x128xf32>
    %55 = arith.addf %54, %47 : vector<8x128xf32>
    %56 = arith.addf %55, %53 : vector<8x128xf32>
    %cst_4 = arith.constant 1.250000e-01 : f32
    %57 = vector.broadcast %cst_4 : f32 to vector<8x128xf32>
    %58 = arith.mulf %56, %57 : vector<8x128xf32>
    %c0_5 = arith.constant 0 : index
    %c0_6 = arith.constant 0 : index
    %59 = vector.load %arg2[%c0_5, %c0_6] : memref<128x128xf32, #tpu.memory_space<vmem>>, vector<128x128xf32>
    %cst_7 = arith.constant dense<0.000000e+00> : vector<8x128xf32>
    %60 = tpu.matmul %58, %59, %cst_7 {dimension_numbers = #tpu.dot_dimension_numbers<[1], [0], [0], [1], [0, 0, 1, 1], [], []>} : vector<8x128xf32>, vector<128x128xf32>, vector<8x128xf32> -> vector<8x128xf32>
    %c0_8 = arith.constant 0 : index
    %c0_9 = arith.constant 0 : index
    %61 = vector.load %arg3[%c0_8, %c0_9] : memref<1x128xf32, #tpu.memory_space<vmem>>, vector<1x128xf32>
    %62 = vector.broadcast %61 : vector<1x128xf32> to vector<8x128xf32>
    %63 = arith.addf %60, %62 : vector<8x128xf32>
    %cst_10 = arith.constant 0.000000e+00 : f32
    %64 = vector.broadcast %cst_10 : f32 to vector<8x128xf32>
    %65 = arith.maximumf %63, %64 : vector<8x128xf32>
    %c0_11 = arith.constant 0 : index
    %c0_12 = arith.constant 0 : index
    %66 = vector.load %arg4[%c0_11, %c0_12] : memref<128x128xf32, #tpu.memory_space<vmem>>, vector<128x128xf32>
    %cst_13 = arith.constant dense<0.000000e+00> : vector<8x128xf32>
    %67 = tpu.matmul %65, %66, %cst_13 {dimension_numbers = #tpu.dot_dimension_numbers<[1], [0], [0], [1], [0, 0, 1, 1], [], []>} : vector<8x128xf32>, vector<128x128xf32>, vector<8x128xf32> -> vector<8x128xf32>
    %c0_14 = arith.constant 0 : index
    %c0_15 = arith.constant 0 : index
    %68 = vector.load %arg5[%c0_14, %c0_15] : memref<1x128xf32, #tpu.memory_space<vmem>>, vector<1x128xf32>
    %69 = vector.broadcast %68 : vector<1x128xf32> to vector<8x128xf32>
    %70 = arith.addf %67, %69 : vector<8x128xf32>
    %c0_16 = arith.constant 0 : index
    %c0_17 = arith.constant 0 : index
    %71 = vector.load %arg6[%c0_16, %c0_17] : memref<8x128xf32, #tpu.memory_space<vmem>>, vector<8x128xf32>
    tpu.vector_store %arg6[%c0_16, %c0_17], %70 {strides = array<i32>} : memref<8x128xf32, #tpu.memory_space<vmem>>, vector<8x128xf32>,
    return
  }
  func.func @transform_0(%arg0: i32) -> (i32, i32) {
    %c0_i32 = arith.constant 0 : i32
    %c0_i32_0 = arith.constant 0 : i32
    return %arg0, %c0_i32 : i32, i32
  }
  func.func @transform_1(%arg0: i32) -> (i32, i32) {
    %c0_i32 = arith.constant 0 : i32
    %c0_i32_0 = arith.constant 0 : i32
    %c0_i32_1 = arith.constant 0 : i32
    return %c0_i32, %c0_i32_0 : i32, i32
  }
  func.func @transform_2(%arg0: i32) -> (i32, i32) {
    %c0_i32 = arith.constant 0 : i32
    %c0_i32_0 = arith.constant 0 : i32
    %c0_i32_1 = arith.constant 0 : i32
    return %c0_i32, %c0_i32_0 : i32, i32
  }
  func.func @transform_3(%arg0: i32) -> (i32, i32) {
    %c0_i32 = arith.constant 0 : i32
    %c0_i32_0 = arith.constant 0 : i32
    %c0_i32_1 = arith.constant 0 : i32
    return %c0_i32, %c0_i32_0 : i32, i32
  }
  func.func @transform_4(%arg0: i32) -> (i32, i32) {
    %c0_i32 = arith.constant 0 : i32
    %c0_i32_0 = arith.constant 0 : i32
    %c0_i32_1 = arith.constant 0 : i32
    return %c0_i32, %c0_i32_0 : i32, i32
  }
  func.func @transform_5(%arg0: i32) -> (i32, i32) {
    %c0_i32 = arith.constant 0 : i32
    %c0_i32_0 = arith.constant 0 : i32
    return %arg0, %c0_i32 : i32, i32
  }
}

</mosaic_0001>

<llo_original>
// kernel: bigram_forward.1
$region0: #{bigram_forward.1}
  #allocation0 [shape = 'u32[]', space=smem, size = 0x4, offset = 0x4, fixed_abs, tag = 'smem constant byte address 0x4 - core index']
  #allocation1 [shape = 'u32[144,128]{1,0:T(1,128)}', space=vmem, size = 0x12000, scoped, tag = 'internal scratch']
  %s0 = inlined_call_operand.vmem [shape: s32[16,8], index: 0, kind: input, shape index: {}]
  %s1 = inlined_call_operand.hbm [shape: f32[128,128], index: 1, kind: input, shape index: {}]
  %s2 = inlined_call_operand.vmem [shape: f32[1,128], index: 2, kind: input, shape index: {}]
  %s3 = inlined_call_operand.hbm [shape: f32[128,128], index: 3, kind: input, shape index: {}]
  %s4 = inlined_call_operand.vmem [shape: f32[1,128], index: 4, kind: input, shape index: {}]
  %s5 = inlined_call_operand.vmem [shape: f32[16,128], index: 5, kind: output, shape index: {}]
  %s6 = sld [smem:[#allocation0]]
  $region61: #{bigram_forward.1} parent=0
    _
  %s8 = ssub.s32 1, %s6
  %s9 = scalar_select 0, %s8, %s6
  $region1: #{bigram_forward.1} parent=0
    #allocation2 [shape = 'u8[65536]{0}', space=vmem, size = 0x10000, scoped, tag = 'input window, operand 1, single buffered']
    #allocation3 [shape = 's32[2]{0}', space=sflag, size = 0x8, scoped, tag = 'scoped memory for bigram_forward.1']
    #allocation4 [shape = 'u8[65536]{0}', space=vmem, size = 0x10000, scoped, tag = 'input window, operand 3, single buffered']
    #allocation5 [shape = 's32[1]{0}', space=sflag, size = 0x4, scoped, tag = 'scoped memory for bigram_forward.1']
    %10 = vsyncpa [#allocation3], 0
    %11 = vsyncpa [#allocation5], 0
    loop: start=0, step=1, limit=4
    $region2: #{bigram_forward.1} parent=1 // loop_pre_header
      _
    $region3: #{bigram_forward.1} parent=1 // loop_header
      %s13 = sphi 0, %s17
      %p14 = scmp.ge.s32.totalorder %s13, 4
      %s23 = sphi 0, %s25
      %s26 = sphi 0, %s23
      %s27 = sphi 0, %s26
      %s43 = sphi 0, %s27
      %s47 = sphi 0, %s47
      %s49 = sphi 0, %s47
      %s50 = sphi 0, %s49
      %s64 = sphi 0, %s50
      %s68 = sphi 0, %s68
      %s70 = sphi 0, %s68
      %s71 = sphi 0, %s70
      %s85 = sphi 0, %s71
      %s89 = sphi 0, %s89
      %s91 = sphi 0, %s89
      %s92 = sphi 0, %s91
      %s106 = sphi 0, %s92
      %s110 = sphi 0, %s110
      %s112 = sphi 0, %s110
      %s113 = sphi 0, %s112
      %s127 = sphi 0, %s113
      %s133 = sphi 0, %s135
      %s136 = sphi 0, %s133
      %s137 = sphi 0, %s136
      %s153 = sphi 0, %s137
    $region4: #{bigram_forward.1} parent=1 // loop_header_branch
      %16 = sbr.rel (%p14) target = $region8
    $region5: #{bigram_forward.1} parent=1 // loop_body
      %s18 = ssub.s32 %s13, 1
      %s19 = ssub.s32 %s13, 2
      %s20 = sadd.s32 %s13, 1
      %s21 = ssub.s32 %s13, %s20
      %p22 = scmp.eq.s32.totalorder %s21, 0
      %s24 = sadd.s32 %s23, 1
      %s25 = scalar_select %p22, %s23, %s24
      %p28 = pneg %p22
      %p29 = scmp.eq.s32.totalorder %s13, 1
      %p30 = por %p28, %p29
      %p31 = scmp.ne.s32.totalorder %s23, %s26
      %p32 = scmp.eq.s32.totalorder %s13, 0
      %p33 = por %p31, %p32
      %p34 = scmp.ne.s32.totalorder %s23, %s26
      %p35 = scmp.eq.s32.totalorder %s18, 1
      %p36 = por %p34, %p35
      %p37 = scmp.ne.s32.totalorder %s26, %s27
      %p38 = scmp.eq.s32.totalorder %s18, 0
      %p39 = por %p37, %p38
      %p40 = scmp.ne.s32.totalorder %s26, %s27
      %p41 = scmp.eq.s32.totalorder %s19, 1
      %p42 = por %p40, %p41
      %p44 = scmp.ne.s32.totalorder %s27, %s43
      %p45 = scmp.eq.s32.totalorder %s19, 0
      %p46 = por %p44, %p45
      %s48 = sadd.s32 %s47, 1
      %p51 = scmp.eq.s32.totalorder %s13, 1
      %p52 = scmp.ne.s32.totalorder %s47, %s49
      %p53 = scmp.eq.s32.totalorder %s13, 0
      %p54 = por %p52, %p53
      %p55 = scmp.ne.s32.totalorder %s47, %s49
      %p56 = scmp.eq.s32.totalorder %s18, 1
      %p57 = por %p55, %p56
      %p58 = scmp.ne.s32.totalorder %s49, %s50
      %p59 = scmp.eq.s32.totalorder %s18, 0
      %p60 = por %p58, %p59
      %p61 = scmp.ne.s32.totalorder %s49, %s50
      %p62 = scmp.eq.s32.totalorder %s19, 1
      %p63 = por %p61, %p62
      %p65 = scmp.ne.s32.totalorder %s50, %s64
      %p66 = scmp.eq.s32.totalorder %s19, 0
      %p67 = por %p65, %p66
      %s69 = sadd.s32 %s68, 1
      %p72 = scmp.eq.s32.totalorder %s13, 1
      %p73 = scmp.ne.s32.totalorder %s68, %s70
      %p74 = scmp.eq.s32.totalorder %s13, 0
      %p75 = por %p73, %p74
      %p76 = scmp.ne.s32.totalorder %s68, %s70
      %p77 = scmp.eq.s32.totalorder %s18, 1
      %p78 = por %p76, %p77
      %p79 = scmp.ne.s32.totalorder %s70, %s71
      %p80 = scmp.eq.s32.totalorder %s18, 0
      %p81 = por %p79, %p80
      %p82 = scmp.ne.s32.totalorder %s70, %s71
      %p83 = scmp.eq.s32.totalorder %s19, 1
      %p84 = por %p82, %p83
      %p86 = scmp.ne.s32.totalorder %s71, %s85
      %p87 = scmp.eq.s32.totalorder %s19, 0
      %p88 = por %p86, %p87
      %s90 = sadd.s32 %s89, 1
      %p93 = scmp.eq.s32.totalorder %s13, 1
      %p94 = scmp.ne.s32.totalorder %s89, %s91
      %p95 = scmp.eq.s32.totalorder %s13, 0
      %p96 = por %p94, %p95
      %p97 = scmp.ne.s32.totalorder %s89, %s91
      %p98 = scmp.eq.s32.totalorder %s18, 1
      %p99 = por %p97, %p98
      %p100 = scmp.ne.s32.totalorder %s91, %s92
      %p101 = scmp.eq.s32.totalorder %s18, 0
      %p102 = por %p100, %p101
      %p103 = scmp.ne.s32.totalorder %s91, %s92
      %p104 = scmp.eq.s32.totalorder %s19, 1
      %p105 = por %p103, %p104
      %p107 = scmp.ne.s32.totalorder %s92, %s106
      %p108 = scmp.eq.s32.totalorder %s19, 0
      %p109 = por %p107, %p108
      %s111 = sadd.s32 %s110, 1
      %p114 = scmp.eq.s32.totalorder %s13, 1
      %p115 = scmp.ne.s32.totalorder %s110, %s112
      %p116 = scmp.eq.s32.totalorder %s13, 0
      %p117 = por %p115, %p116
      %p118 = scmp.ne.s32.totalorder %s110, %s112
      %p119 = scmp.eq.s32.totalorder %s18, 1
      %p120 = por %p118, %p119
      %p121 = scmp.ne.s32.totalorder %s112, %s113
      %p122 = scmp.eq.s32.totalorder %s18, 0
      %p123 = por %p121, %p122
      %p124 = scmp.ne.s32.totalorder %s112, %s113
      %p125 = scmp.eq.s32.totalorder %s19, 1
      %p126 = por %p124, %p125
      %p128 = scmp.ne.s32.totalorder %s113, %s127
      %p129 = scmp.eq.s32.totalorder %s19, 0
      %p130 = por %p128, %p129
      %s131 = ssub.s32 %s13, %s20
      %p132 = scmp.eq.s32.totalorder %s131, 0
      %s134 = sadd.s32 %s133, 1
      %s135 = scalar_select %p132, %s133, %s134
      %p138 = pneg %p132
      %p139 = scmp.eq.s32.totalorder %s13, 1
      %p140 = por %p138, %p139
      %p141 = scmp.ne.s32.totalorder %s133, %s136
      %p142 = scmp.eq.s32.totalorder %s13, 0
      %p143 = por %p141, %p142
      %p144 = scmp.ne.s32.totalorder %s133, %s136
      %p145 = scmp.eq.s32.totalorder %s18, 1
      %p146 = por %p144, %p145
      %p147 = scmp.ne.s32.totalorder %s136, %s137
      %p148 = scmp.eq.s32.totalorder %s18, 0
      %p149 = por %p147, %p148
      %p150 = scmp.ne.s32.totalorder %s136, %s137
      %p151 = scmp.eq.s32.totalorder %s19, 1
      %p152 = por %p150, %p151
      %p154 = scmp.ne.s32.totalorder %s137, %s153
      %p155 = scmp.eq.s32.totalorder %s19, 0
      %p156 = por %p154, %p155
      %p157 = scmp.le.s32.totalorder 1, %s13
      %p158 = scmp.lt.s32.totalorder %s13, 3
      %p159 = pnand %p157, %p158
      %p160 = pneg %p159
      // Predicated region
      $region9: #{bigram_forward.1} parent=5 // pred_check
        _
      $region10: #{bigram_forward.1} parent=5 // pred_check_branch
        %162 = sbr.rel (%p159) target = $region12
      $region11: #{bigram_forward.1} parent=5 // pred_region
        %s163 = ssub.s32 %s13, 1
        // Predicated region
        $region13: #{bigram_forward.1} parent=11 // pred_check
          %p164 = pneg %p60
        $region14: #{bigram_forward.1} parent=11 // pred_check_branch
          %166 = sbr.rel (%p164) target = $region16
        $region15: #{bigram_forward.1} parent=11 // pred_region
          %s168 = ssub.s32 2048, 2048
          %169 = vsyncadd [#allocation3], %s168
          %s170 = sshll.u32 [#allocation2], 4
          %s171 = int_to_ptr.vmem [resolvable:$true] %s170
          %176 = dma.hbm_to_vmem [thread:$0]  %s1, 2048, %s171, [#allocation3], 128, 128, 8
        $region16: #{bigram_forward.1} parent=11 // pred_fallthru
          _
        // Predicated region
        $region17: #{bigram_forward.1} parent=11 // pred_check
          %p177 = pneg %p81
        $region18: #{bigram_forward.1} parent=11 // pred_check_branch
          %179 = sbr.rel (%p177) target = $region20
        $region19: #{bigram_forward.1} parent=11 // pred_region
          _
        $region20: #{bigram_forward.1} parent=11 // pred_fallthru
          _
        // Predicated region
        $region21: #{bigram_forward.1} parent=11 // pred_check
          %p180 = pneg %p102
        $region22: #{bigram_forward.1} parent=11 // pred_check_branch
          %182 = sbr.rel (%p180) target = $region24
        $region23: #{bigram_forward.1} parent=11 // pred_region
          %s184 = ssub.s32 2048, 2048
          %185 = vsyncadd [#allocation5], %s184
          %s186 = sshll.u32 [#allocation4], 4
          %s187 = int_to_ptr.vmem [resolvable:$true] %s186
          %192 = dma.hbm_to_vmem [thread:$0]  %s3, 2048, %s187, [#allocation5], 128, 128, 8
        $region24: #{bigram_forward.1} parent=11 // pred_fallthru
          _
        // Predicated region
        $region25: #{bigram_forward.1} parent=11 // pred_check
          %p193 = pneg %p123
        $region26: #{bigram_forward.1} parent=11 // pred_check_branch
          %195 = sbr.rel (%p193) target = $region28
        $region27: #{bigram_forward.1} parent=11 // pred_region
          _
        $region28: #{bigram_forward.1} parent=11 // pred_fallthru
          _
      $region12: #{bigram_forward.1} parent=5 // pred_fallthru
        _
      %p196 = scmp.lt.s32.totalorder %s13, 2
      // Predicated region
      $region29: #{bigram_forward.1} parent=5 // pred_check
        %p197 = pneg %p196
      $region30: #{bigram_forward.1} parent=5 // pred_check_branch
        %199 = sbr.rel (%p197) target = $region32
      $region31: #{bigram_forward.1} parent=5 // pred_region
        // Predicated region
        $region33: #{bigram_forward.1} parent=31 // pred_check
          %p200 = pneg %p33
        $region34: #{bigram_forward.1} parent=31 // pred_check_branch
          %202 = sbr.rel (%p200) target = $region36
        $region35: #{bigram_forward.1} parent=31 // pred_region
          %p203 = scmp.lt.s32.totalorder %s13, 1
          %s204 = scalar_select %p203, %s13, 1
          %s205 = smul.addr %s204, 8
          %s206 = scalar_lea.vmem %s0, %s205
        $region36: #{bigram_forward.1} parent=31 // pred_fallthru
          _
      $region32: #{bigram_forward.1} parent=5 // pred_fallthru
        _
      %p207 = scmp.le.s32.totalorder 1, %s13
      %p208 = scmp.lt.s32.totalorder %s13, 3
      %p209 = pnand %p207, %p208
      %p210 = pneg %p209
      // Predicated region
      $region37: #{bigram_forward.1} parent=5 // pred_check
        _
      $region38: #{bigram_forward.1} parent=5 // pred_check_branch
        %212 = sbr.rel (%p209) target = $region40
      $region39: #{bigram_forward.1} parent=5 // pred_region
        %s213 = ssub.s32 %s13, 1
        // Predicated region
        $region41: #{bigram_forward.1} parent=39 // pred_check
          %p214 = pneg %p60
        $region42: #{bigram_forward.1} parent=39 // pred_check_branch
          %216 = sbr.rel (%p214) target = $region44
        $region43: #{bigram_forward.1} parent=39 // pred_region
          %217 = dma.done [#allocation3], 2048
        $region44: #{bigram_forward.1} parent=39 // pred_fallthru
          _
        // Predicated region
        $region45: #{bigram_forward.1} parent=39 // pred_check
          %p218 = pneg %p102
        $region46: #{bigram_forward.1} parent=39 // pred_check_branch
          %220 = sbr.rel (%p218) target = $region48
        $region47: #{bigram_forward.1} parent=39 // pred_region
          %221 = dma.done [#allocation5], 2048
        $region48: #{bigram_forward.1} parent=39 // pred_fallthru
          _
        %p222 = scmp.lt.s32.totalorder %s18, 1
        %s223 = scalar_select %p222, %s18, 1
        %s224 = smul.addr %s223, 8
        %s225 = scalar_lea.vmem %s0, %s224
        %p226 = pneg %p39
        %p227 = pneg %p36
        %p228 = pneg %p60
        %p229 = pneg %p57
        %p230 = pneg %p81
        %p231 = pneg %p78
        %p232 = pneg %p102
        %p233 = pneg %p99
        %p234 = pneg %p123
        %p235 = pneg %p120
        %p236 = pneg %p149
        %p237 = pneg %p146
        %p238 = scmp.lt.s32.totalorder %s18, 1
        %s239 = scalar_select %p238, %s18, 1
        %s240 = smul.addr %s239, 8
        %s241 = scalar_lea.vmem %s5, %s240
        %p242 = scmp.lt.s32.totalorder %s18, 1
        %s243 = scalar_select %p242, %s18, 1
        %s244 = smul.addr %s243, 8
        %s245 = scalar_lea.vmem %s0, %s244
        %p246 = scmp.lt.s32.totalorder %s18, 1
        %s247 = scalar_select %p246, %s18, 1
        %s248 = smul.addr %s247, 8
        %s249 = scalar_lea.vmem %s5, %s248
        %v250 = vld [vmem:[%s245] sm:$0xff]
        %v251 = vlaneseq
        %v252 = vand.u32 %v251, 127
        %253 = vset.pattern.permute.xlu0 0
        %254 = vperm.xlu0 %253, %v250
        %v255 = vpop.permute.xlu0 %254
        %vm256 = vcmp.eq.s32.totalorder %v252, %v255
        %v257 = vsel %vm256, 1, 0
        %v258 = vcvt.s32.f32 %v257
        %v259 = vadd.f32 %v258, 0.0
        %260 = vset.pattern.permute.xlu0 1
        %261 = vperm.xlu0 %260, %v250
        %v262 = vpop.permute.xlu0 %261
        %vm263 = vcmp.eq.s32.totalorder %v252, %v262
        %v264 = vsel %vm263, 1, 0
        %v265 = vcvt.s32.f32 %v264
        %v266 = vadd.f32 %v265, 0.0
        %267 = vset.pattern.permute.xlu0 2
        %268 = vperm.xlu0 %267, %v250
        %v269 = vpop.permute.xlu0 %268
        %vm270 = vcmp.eq.s32.totalorder %v252, %v269
        %v271 = vsel %vm270, 1, 0
        %v272 = vcvt.s32.f32 %v271
        %v273 = vadd.f32 %v272, 0.0
        %274 = vset.pattern.permute.xlu0 3
        %275 = vperm.xlu0 %274, %v250
        %v276 = vpop.permute.xlu0 %275
        %vm277 = vcmp.eq.s32.totalorder %v252, %v276
        %v278 = vsel %vm277, 1, 0
        %v279 = vcvt.s32.f32 %v278
        %v280 = vadd.f32 %v279, 0.0
        %281 = vset.pattern.permute.xlu0 4
        %282 = vperm.xlu0 %281, %v250
        %v283 = vpop.permute.xlu0 %282
        %vm284 = vcmp.eq.s32.totalorder %v252, %v283
        %v285 = vsel %vm284, 1, 0
        %v286 = vcvt.s32.f32 %v285
        %v287 = vadd.f32 %v259, %v286
        %288 = vset.pattern.permute.xlu0 5
        %289 = vperm.xlu0 %288, %v250
        %v290 = vpop.permute.xlu0 %289
        %vm291 = vcmp.eq.s32.totalorder %v252, %v290
        %v292 = vsel %vm291, 1, 0
        %v293 = vcvt.s32.f32 %v292
        %v294 = vadd.f32 %v266, %v293
        %295 = vset.pattern.permute.xlu0 6
        %296 = vperm.xlu0 %295, %v250
        %v297 = vpop.permute.xlu0 %296
        %vm298 = vcmp.eq.s32.totalorder %v252, %v297
        %v299 = vsel %vm298, 1, 0
        %v300 = vcvt.s32.f32 %v299
        %v301 = vadd.f32 %v273, %v300
        %302 = vset.pattern.permute.xlu0 7
        %303 = vperm.xlu0 %302, %v250
        %v304 = vpop.permute.xlu0 %303
        %vm305 = vcmp.eq.s32.totalorder %v252, %v304
        %v306 = vsel %vm305, 1, 0
        %v307 = vcvt.s32.f32 %v306
        %v308 = vadd.f32 %v280, %v307
        %v309 = vadd.f32 %v287, %v294
        %v310 = vadd.f32 %v309, %v301
        %v311 = vadd.f32 %v310, %v308
        %v312 = vmul.f32 %v311, 0.125
        %v313 = vld [vmem:[#allocation2] sm:$0xff]
        %v314 = vld [vmem:[#allocation2 + $0x8] sm:$0xff]
        %v315 = vld [vmem:[#allocation2 + $0x10] sm:$0xff]
        %v316 = vld [vmem:[#allocation2 + $0x18] sm:$0xff]
        %v317 = vld [vmem:[#allocation2 + $0x20] sm:$0xff]
        %v318 = vld [vmem:[#allocation2 + $0x28] sm:$0xff]
        %v319 = vld [vmem:[#allocation2 + $0x30] sm:$0xff]
        %v320 = vld [vmem:[#allocation2 + $0x38] sm:$0xff]
        %v321 = vld [vmem:[#allocation2 + $0x40] sm:$0xff]
        %v322 = vld [vmem:[#allocation2 + $0x48] sm:$0xff]
        %v323 = vld [vmem:[#allocation2 + $0x50] sm:$0xff]
        %v324 = vld [vmem:[#allocation2 + $0x58] sm:$0xff]
        %v325 = vld [vmem:[#allocation2 + $0x60] sm:$0xff]
        %v326 = vld [vmem:[#allocation2 + $0x68] sm:$0xff]
        %v327 = vld [vmem:[#allocation2 + $0x70] sm:$0xff]
        %v328 = vld [vmem:[#allocation2 + $0x78] sm:$0xff]
        %v329 = vld [vmem:[%s2] sm:$0x1]
        %v331 = vlaneseq
        %v332 = vshrl.u32 %v331, 7
        %v333 = vsub.s32 0, %v332
        %v334 = vrot.slane %v329, %v333
        %336 = vmatprep.subr.mxu0 0.0
        %337 = vmatpush1.msra.mxu0 %v313
        %338 = vmatprep.subr.mxu0 0.0
        %339 = vmatpush1.msra.mxu0 %v314
        %340 = vmatprep.subr.mxu0 0.0
        %341 = vmatpush1.msra.mxu0 %v315
        %342 = vmatprep.subr.mxu0 0.0
        %343 = vmatpush1.msra.mxu0 %v316
        %344 = vmatprep.subr.mxu0 0.0
        %345 = vmatpush1.msra.mxu0 %v317
        %346 = vmatprep.subr.mxu0 0.0
        %347 = vmatpush1.msra.mxu0 %v318
        %348 = vmatprep.subr.mxu0 0.0
        %349 = vmatpush1.msra.mxu0 %v319
        %350 = vmatprep.subr.mxu0 0.0
        %351 = vmatpush1.msra.mxu0 %v320
        %352 = vmatprep.subr.mxu0 0.0
        %353 = vmatpush1.msra.mxu0 %v321
        %354 = vmatprep.subr.mxu0 0.0
        %355 = vmatpush1.msra.mxu0 %v322
        %356 = vmatprep.subr.mxu0 0.0
        %357 = vmatpush1.msra.mxu0 %v323
        %358 = vmatprep.subr.mxu0 0.0
        %359 = vmatpush1.msra.mxu0 %v324
        %360 = vmatprep.subr.mxu0 0.0
        %361 = vmatpush1.msra.mxu0 %v325
        %362 = vmatprep.subr.mxu0 0.0
        %363 = vmatpush1.msra.mxu0 %v326
        %364 = vmatprep.subr.mxu0 0.0
        %365 = vmatpush1.msra.mxu0 %v327
        %366 = vmatprep.subr.mxu0 0.0
        %367 = vmatpush1.msra.mxu0 %v328
        %368 = vmatprep.subr.mxu0 0.0
        %369 = vmatpush1.msra.mxu0 0.0
        %370 = vmatprep.subr.mxu0 0.0
        %371 = vmatpush1.msra.mxu0 0.0
        %372 = vmatprep.subr.mxu0 0.0
        %373 = vmatpush1.msra.mxu0 0.0
        %374 = vmatprep.subr.mxu0 0.0
        %375 = vmatpush1.msra.mxu0 0.0
        %376 = vmatprep.subr.mxu0 0.0
        %377 = vmatpush1.msra.mxu0 0.0
        %378 = vmatprep.subr.mxu0 0.0
        %379 = vmatpush1.msra.mxu0 0.0
        %380 = vmatprep.subr.mxu0 0.0
        %381 = vmatpush1.msra.mxu0 0.0
        %382 = vmatprep.subr.mxu0 0.0
        %383 = vmatpush1.msra.mxu0 0.0
        %384 = vmatprep.subr.mxu0 0.0
        %385 = vmatpush1.msra.mxu0 0.0
        %386 = vmatprep.subr.mxu0 0.0
        %387 = vmatpush1.msra.mxu0 0.0
        %388 = vmatprep.subr.mxu0 0.0
        %389 = vmatpush1.msra.mxu0 0.0
        %390 = vmatprep.subr.mxu0 0.0
        %391 = vmatpush1.msra.mxu0 0.0
        %392 = vmatprep.subr.mxu0 0.0
        %393 = vmatpush1.msra.mxu0 0.0
        %394 = vmatprep.subr.mxu0 0.0
        %395 = vmatpush1.msra.mxu0 0.0
        %396 = vmatprep.subr.mxu0 0.0
        %397 = vmatpush1.msra.mxu0 0.0
        %398 = vmatprep.subr.mxu0 0.0
        %399 = vmatpush1.msra.mxu0 0.0
        %400 = vmatprep.mubr.f32.mxu0 0.0
        %401 = vmatmul.mubr.f32.gmra.mrb[0].mxu0 %v312
        %v402 = vpop.f32.mrb[0].mxu0
        %v403 = vadd.f32 %v334, %v402
        %v404 = vpop.f32.mrb[0].mxu0
        %405 = vdwg.mxu0
        %v406 = vmax.f32 %v403, 0.0
        %v407 = vld [vmem:[#allocation4] sm:$0xff]
        %v408 = vld [vmem:[#allocation4 + $0x8] sm:$0xff]
        %v409 = vld [vmem:[#allocation4 + $0x10] sm:$0xff]
        %v410 = vld [vmem:[#allocation4 + $0x18] sm:$0xff]
        %v411 = vld [vmem:[#allocation4 + $0x20] sm:$0xff]
        %v412 = vld [vmem:[#allocation4 + $0x28] sm:$0xff]
        %v413 = vld [vmem:[#allocation4 + $0x30] sm:$0xff]
        %v414 = vld [vmem:[#allocation4 + $0x38] sm:$0xff]
        %v415 = vld [vmem:[#allocation4 + $0x40] sm:$0xff]
        %v416 = vld [vmem:[#allocation4 + $0x48] sm:$0xff]
        %v417 = vld [vmem:[#allocation4 + $0x50] sm:$0xff]
        %v418 = vld [vmem:[#allocation4 + $0x58] sm:$0xff]
        %v419 = vld [vmem:[#allocation4 + $0x60] sm:$0xff]
        %v420 = vld [vmem:[#allocation4 + $0x68] sm:$0xff]
        %v421 = vld [vmem:[#allocation4 + $0x70] sm:$0xff]
        %v422 = vld [vmem:[#allocation4 + $0x78] sm:$0xff]
        %v423 = vld [vmem:[%s4] sm:$0x1]
        %v425 = vlaneseq
        %v426 = vshrl.u32 %v425, 7
        %v427 = vsub.s32 0, %v426
        %v428 = vrot.slane %v423, %v427
        %430 = vmatprep.subr.mxu0 0.0
        %431 = vmatpush1.msra.mxu0 %v407
        %432 = vmatprep.subr.mxu0 0.0
        %433 = vmatpush1.msra.mxu0 %v408
        %434 = vmatprep.subr.mxu0 0.0
        %435 = vmatpush1.msra.mxu0 %v409
        %436 = vmatprep.subr.mxu0 0.0
        %437 = vmatpush1.msra.mxu0 %v410
        %438 = vmatprep.subr.mxu0 0.0
        %439 = vmatpush1.msra.mxu0 %v411
        %440 = vmatprep.subr.mxu0 0.0
        %441 = vmatpush1.msra.mxu0 %v412
        %442 = vmatprep.subr.mxu0 0.0
        %443 = vmatpush1.msra.mxu0 %v413
        %444 = vmatprep.subr.mxu0 0.0
        %445 = vmatpush1.msra.mxu0 %v414
        %446 = vmatprep.subr.mxu0 0.0
        %447 = vmatpush1.msra.mxu0 %v415
        %448 = vmatprep.subr.mxu0 0.0
        %449 = vmatpush1.msra.mxu0 %v416
        %450 = vmatprep.subr.mxu0 0.0
        %451 = vmatpush1.msra.mxu0 %v417
        %452 = vmatprep.subr.mxu0 0.0
        %453 = vmatpush1.msra.mxu0 %v418
        %454 = vmatprep.subr.mxu0 0.0
        %455 = vmatpush1.msra.mxu0 %v419
        %456 = vmatprep.subr.mxu0 0.0
        %457 = vmatpush1.msra.mxu0 %v420
        %458 = vmatprep.subr.mxu0 0.0
        %459 = vmatpush1.msra.mxu0 %v421
        %460 = vmatprep.subr.mxu0 0.0
        %461 = vmatpush1.msra.mxu0 %v422
        %462 = vmatprep.subr.mxu0 0.0
        %463 = vmatpush1.msra.mxu0 0.0
        %464 = vmatprep.subr.mxu0 0.0
        %465 = vmatpush1.msra.mxu0 0.0
        %466 = vmatprep.subr.mxu0 0.0
        %467 = vmatpush1.msra.mxu0 0.0
        %468 = vmatprep.subr.mxu0 0.0
        %469 = vmatpush1.msra.mxu0 0.0
        %470 = vmatprep.subr.mxu0 0.0
        %471 = vmatpush1.msra.mxu0 0.0
        %472 = vmatprep.subr.mxu0 0.0
        %473 = vmatpush1.msra.mxu0 0.0
        %474 = vmatprep.subr.mxu0 0.0
        %475 = vmatpush1.msra.mxu0 0.0
        %476 = vmatprep.subr.mxu0 0.0
        %477 = vmatpush1.msra.mxu0 0.0
        %478 = vmatprep.subr.mxu0 0.0
        %479 = vmatpush1.msra.mxu0 0.0
        %480 = vmatprep.subr.mxu0 0.0
        %481 = vmatpush1.msra.mxu0 0.0
        %482 = vmatprep.subr.mxu0 0.0
        %483 = vmatpush1.msra.mxu0 0.0
        %484 = vmatprep.subr.mxu0 0.0
        %485 = vmatpush1.msra.mxu0 0.0
        %486 = vmatprep.subr.mxu0 0.0
        %487 = vmatpush1.msra.mxu0 0.0
        %488 = vmatprep.subr.mxu0 0.0
        %489 = vmatpush1.msra.mxu0 0.0
        %490 = vmatprep.subr.mxu0 0.0
        %491 = vmatpush1.msra.mxu0 0.0
        %492 = vmatprep.subr.mxu0 0.0
        %493 = vmatpush1.msra.mxu0 0.0
        %494 = vmatprep.mubr.f32.mxu0 0.0
        %495 = vmatmul.mubr.f32.gmra.mrb[0].mxu0 %v406
        %v496 = vpop.f32.mrb[0].mxu0
        %v497 = vadd.f32 %v428, %v496
        %v498 = vpop.f32.mrb[0].mxu0
        %499 = vdwg.mxu0
        %500 = vst [vmem:[%s249] sm:$0xff] %v497
        %p501 = scmp.lt.s32.totalorder %s18, 1
        %s502 = scalar_select %p501, %s18, 1
        %s503 = smul.addr %s502, 8
        %s504 = scalar_lea.vmem %s5, %s503
        // Predicated region
        $region49: #{bigram_forward.1} parent=39 // pred_check
          %p505 = pneg %p146
        $region50: #{bigram_forward.1} parent=39 // pred_check_branch
          %507 = sbr.rel (%p505) target = $region52
        $region51: #{bigram_forward.1} parent=39 // pred_region
          _
        $region52: #{bigram_forward.1} parent=39 // pred_fallthru
          _
      $region40: #{bigram_forward.1} parent=5 // pred_fallthru
        _
      %p508 = scmp.le.s32.totalorder 2, %s13
      // Predicated region
      $region53: #{bigram_forward.1} parent=5 // pred_check
        %p509 = pneg %p508
      $region54: #{bigram_forward.1} parent=5 // pred_check_branch
        %511 = sbr.rel (%p509) target = $region56
      $region55: #{bigram_forward.1} parent=5 // pred_region
        %s512 = ssub.s32 %s13, 2
        // Predicated region
        $region57: #{bigram_forward.1} parent=55 // pred_check
          %p513 = pneg %p152
        $region58: #{bigram_forward.1} parent=55 // pred_check_branch
          %515 = sbr.rel (%p513) target = $region60
        $region59: #{bigram_forward.1} parent=55 // pred_region
          %p516 = scmp.lt.s32.totalorder %s19, 1
          %s517 = scalar_select %p516, %s19, 1
          %s518 = smul.addr %s517, 8
          %s519 = scalar_lea.vmem %s5, %s518
        $region60: #{bigram_forward.1} parent=55 // pred_fallthru
          _
      $region56: #{bigram_forward.1} parent=5 // pred_fallthru
        _
    $region6: #{bigram_forward.1} parent=1 // loop_footer
      %s17 = sadd.s32 1, %s13
    $region7: #{bigram_forward.1} parent=1 // loop_footer_branch
      %12 = sbr.rel target = $region3
    $region8: #{bigram_forward.1} parent=1 // loop_exit
      _
    %520 = vsyncpa [#allocation3], 1
    %s521 = scalar_lea.sflag [#allocation3], 1
    %522 = vsyncpa %s521, 1
    %523 = vsyncpa [#allocation5], 1

</llo_original>
